<compile_context>
chip_gen: v7x
topology: tpu7x:2x2x1
jax: 0.10.0
libtpu: 0.0.40
codegen_flags: <defaults>
</compile_context>

<pallas_src>
import jax
import jax.numpy as jnp
from jax.experimental import pallas as pl
from jax.experimental.pallas import tpu as pltpu

_LANE = 128      # vreg lane width
_SUBLANE = 8     # vreg sublane count (f32)


def _round_up(n, m):
    return ((n + m - 1) // m) * m


def _pick_max_tb():
    """Batch-tile cap per generation.

    Sized so each grid step streams enough x bytes to amortize the ~0.35 us
    fixed step overhead, while the double-buffered x tiles + f32 intermediates
    stay comfortably inside the default scoped-VMEM budget (16 MiB on v5e,
    32 MiB on v6e/v7x).  The single "parallel" grid axis lets v7x's two
    TensorCores split the batch grid; it is a no-op on v5e/v6e.
    """
    try:
        kind = jax.devices()[0].device_kind.lower()
    except Exception:
        return 2048
    if "v7" in kind:
        return 8192   # ~3.2 TB/s HBM: ~4 MiB x/step; ~16-20 MiB working set < 32 MiB scoped
    if "v6" in kind:
        return 4096   # ~1.4 TB/s HBM: ~2 MiB x/step
    return 2048       # v5e: 16 MiB scoped default; 1 MiB x/step already amortizes overhead


def backfc_kernel(x_ref, w1_ref, b1_ref, w2_ref, b2_ref, o_ref):
    # x tile (TB, in_dim).  Prefer bf16 input from the producer; cast here
    # only if it arrives wider (never as a standalone wrapper op).
    x = x_ref[...]
    if x.dtype != jnp.bfloat16:
        x = x.astype(jnp.bfloat16)

    # fc1: (TB, in_dim) @ (in_dim, hid_p) -> f32 accumulate on the MXU.
    h = jnp.dot(x, w1_ref[...], preferred_element_type=jnp.float32)
    # bias + ReLU in f32 on the VPU (zero-padded hidden cols stay exactly 0).
    h = jnp.maximum(h + b1_ref[...], 0.0)

    # fc2: lane-dense (TB, hid_p) @ (hid_p, cls_p=128) -> f32 accumulate.
    o = jnp.dot(h.astype(jnp.bfloat16), w2_ref[...],
                preferred_element_type=jnp.float32)

    # Narrow HBM store: keep only the real class columns.  Masked vst is
    # negligible here (store slot / VPU have large slack; kernel is mem-bound).
    nc = o_ref.shape[1]
    o_ref[...] = (o[:, :nc] + b2_ref[...]).astype(o_ref.dtype)


def prepare_params(w1, b1, w2, b2):
    """One-time layout plumbing (call at init, NOT per forward).

    w1: (hidden, in_dim)  b1: (hidden,)  w2: (classes, hidden)  b2: (classes,)
    Returns pre-transposed, zero-padded (VMEM-lane-dense) bf16 weights and f32
    row biases.  b2 stays narrow (1, num_classes) -- it is added after the
    class-axis slice and its width tells the wrapper the true output width.
    """
    hidden, in_dim = w1.shape
    num_classes = w2.shape[0]
    hid_p = _round_up(hidden, _LANE)
    cls_p = _round_up(num_classes, _LANE)

    w1t = jnp.zeros((in_dim, hid_p), jnp.bfloat16)
    w1t = w1t.at[:, :hidden].set(w1.T.astype(jnp.bfloat16))
    b1r = jnp.zeros((1, hid_p), jnp.float32).at[:, :hidden].set(b1)

    # w2 keeps 128-lane padding so the fc2 matmul is lane-dense in VMEM; the
    # padded columns are sliced off before the HBM store.
    w2t = jnp.zeros((hid_p, cls_p), jnp.bfloat16)
    w2t = w2t.at[:hidden, :num_classes].set(w2.T.astype(jnp.bfloat16))
    b2r = b2.reshape(1, num_classes).astype(jnp.float32)

    return w1t, b1r, w2t, b2r


@jax.jit
def backfc_forward(x, w1t_p, b1_p, w2t_p, b2_p):
    """x: (B, in_dim) f32 or bf16; padded params from prepare_params.
       Returns (B, num_classes) f32."""
    B, in_dim = x.shape
    hid_p = w1t_p.shape[1]
    num_classes = b2_p.shape[1]

    # Balanced batch tile: as large as the per-generation cap allows, split
    # evenly across tiles (multiple of 8 sublanes) so a non-divisible B costs
    # at most one slightly-short tail tile -- no wrapper jnp.pad copy of x.
    max_tb = _pick_max_tb()
    n_tiles = pl.cdiv(B, max_tb)
    TB = _round_up(pl.cdiv(B, n_tiles), _SUBLANE)
    grid = (pl.cdiv(B, TB),)

    cost = pl.CostEstimate(
        flops=2 * B * in_dim * hid_p + 2 * B * hid_p * w2t_p.shape[1],
        transcendentals=0,
        bytes_accessed=(B * in_dim * x.dtype.itemsize
                        + w1t_p.size * 2 + b1_p.size * 4
                        + w2t_p.size * 2 + b2_p.size * 4
                        + B * num_classes * 4),
    )

    out = pl.pallas_call(
        backfc_kernel,
        out_shape=jax.ShapeDtypeStruct((B, num_classes), jnp.float32),
        grid_spec=pltpu.PrefetchScalarGridSpec(
            num_scalar_prefetch=0,
            grid=grid,
            in_specs=[
                # x: streamed on B.  Sweep pipeline_mode=pl.Buffered(3) only
                # if a profile shows exposed DMA at step boundaries.
                pl.BlockSpec((TB, in_dim), lambda i: (i, 0)),
                pl.BlockSpec((in_dim, hid_p), lambda i: (0, 0)),        # w1: resident
                pl.BlockSpec((1, hid_p), lambda i: (0, 0)),             # b1
                pl.BlockSpec((hid_p, w2t_p.shape[1]), lambda i: (0, 0)),  # w2: resident
                pl.BlockSpec((1, num_classes), lambda i: (0, 0)),       # b2 (narrow)
            ],
            # Narrow HBM output: last block dim equals the full array dim, so
            # the (8,128) rule is satisfied; partial tail-tile writes are
            # masked by Pallas (garbage rows from a ragged x tile never land).
            out_specs=pl.BlockSpec((TB, num_classes), lambda i: (i, 0)),
        ),
        compiler_params=pltpu.CompilerParams(
            dimension_semantics=("parallel",)),   # megacore shard on v7x
        cost_estimate=cost,
    )(x, w1t_p, b1_p, w2t_p, b2_p)

    return out


def init_params(key, in_dim=128, hidden_dim=64, num_classes=2):
    """Deterministic init matching torch.nn.Linear default (U(-1/sqrt(fan_in)))."""
    k1, k2, k3, k4 = jax.random.split(key, 4)
    bound1 = 1.0 / jnp.sqrt(in_dim)
    bound2 = 1.0 / jnp.sqrt(hidden_dim)
    w1 = jax.random.uniform(k1, (hidden_dim, in_dim), jnp.float32, -bound1, bound1)
    b1 = jax.random.uniform(k2, (hidden_dim,), jnp.float32, -bound1, bound1)
    w2 = jax.random.uniform(k3, (num_classes, hidden_dim), jnp.float32, -bound2, bound2)
    b2 = jax.random.uniform(k4, (num_classes,), jnp.float32, -bound2, bound2)
    return w1, b1, w2, b2


if __name__ == "__main__":
    key = jax.random.PRNGKey(0)
    kx, kp = jax.random.split(key)

    B, in_dim, hidden_dim, num_classes = 8, 128, 64, 2
    x = jax.random.normal(kx, (B, in_dim), jnp.float32)
    w1, b1, w2, b2 = init_params(kp, in_dim, hidden_dim, num_classes)

    # One-time layout prep (transpose / pad / bf16) -- hoisted out of the call path.
    w1t_p, b1_p, w2t_p, b2_p = prepare_params(w1, b1, w2, b2)

    out = backfc_forward(x, w1t_p, b1_p, w2t_p, b2_p)
    out = jax.block_until_ready(out)

    # Reference in plain JAX f32 (same math as the PyTorch module).
    # bf16 MXU operands => loosened tolerance.
    ref = jnp.maximum(x @ w1.T + b1, 0.0) @ w2.T + b2
    assert out.shape == (B, num_classes)
    assert jnp.allclose(out, ref, atol=3e-2, rtol=3e-2), (
        f"max abs err {jnp.max(jnp.abs(out - ref))}")

    print("KERNEL_OK")
</pallas_src>

<mosaic_0001>
module attributes {stable_mosaic.version = 11 : i64} {
  func.func @backfc_kernel(%arg0: i32, %arg1: memref<8x128xf32, #tpu.memory_space<vmem>>, %arg2: memref<128x128xbf16, #tpu.memory_space<vmem>>, %arg3: memref<1x128xf32, #tpu.memory_space<vmem>>, %arg4: memref<128x128xbf16, #tpu.memory_space<vmem>>, %arg5: memref<1x2xf32, #tpu.memory_space<vmem>>, %arg6: memref<8x2xf32, #tpu.memory_space<vmem>>) attributes {dimension_semantics = [#tpu.dimension_semantics<parallel>], iteration_bounds = array<i64: 1>, scalar_prefetch = 0 : i64, scratch_operands = 0 : i64, tpu.core_type = #tpu.core_type<tc>, window_params = [{transform_indices = @transform_0, window_bounds = array<i64: 8, 128>}, {pipeline_mode = #tpu.pipeline_mode<synchronous>, transform_indices = @transform_1, window_bounds = array<i64: 128, 128>}, {pipeline_mode = #tpu.pipeline_mode<synchronous>, transform_indices = @transform_2, window_bounds = array<i64: 1, 128>}, {pipeline_mode = #tpu.pipeline_mode<synchronous>, transform_indices = @transform_3, window_bounds = array<i64: 128, 128>}, {pipeline_mode = #tpu.pipeline_mode<synchronous>, transform_indices = @transform_4, window_bounds = array<i64: 1, 2>}, {transform_indices = @transform_5, window_bounds = array<i64: 8, 2>}]} {
    %c0 = arith.constant 0 : index
    %c0_0 = arith.constant 0 : index
    %0 = vector.load %arg1[%c0, %c0_0] : memref<8x128xf32, #tpu.memory_space<vmem>>, vector<8x128xf32>
    %1 = arith.truncf %0 : vector<8x128xf32> to vector<8x128xbf16>
    %c0_1 = arith.constant 0 : index
    %c0_2 = arith.constant 0 : index
    %2 = vector.load %arg2[%c0_1, %c0_2] : memref<128x128xbf16, #tpu.memory_space<vmem>>, vector<128x128xbf16>
    %cst = arith.constant dense<0.000000e+00> : vector<8x128xf32>
    %3 = tpu.matmul %1, %2, %cst {dimension_numbers = #tpu.dot_dimension_numbers<[1], [0], [0], [1], [0, 0, 1, 1], [], []>} : vector<8x128xbf16>, vector<128x128xbf16>, vector<8x128xf32> -> vector<8x128xf32>
    %c0_3 = arith.constant 0 : index
    %c0_4 = arith.constant 0 : index
    %4 = vector.load %arg3[%c0_3, %c0_4] : memref<1x128xf32, #tpu.memory_space<vmem>>, vector<1x128xf32>
    %5 = vector.broadcast %4 : vector<1x128xf32> to vector<8x128xf32>
    %6 = arith.addf %3, %5 : vector<8x128xf32>
    %cst_5 = arith.constant 0.000000e+00 : f32
    %7 = vector.broadcast %cst_5 : f32 to vector<8x128xf32>
    %8 = arith.maximumf %6, %7 : vector<8x128xf32>
    %9 = arith.truncf %8 : vector<8x128xf32> to vector<8x128xbf16>
    %c0_6 = arith.constant 0 : index
    %c0_7 = arith.constant 0 : index
    %10 = vector.load %arg4[%c0_6, %c0_7] : memref<128x128xbf16, #tpu.memory_space<vmem>>, vector<128x128xbf16>
    %cst_8 = arith.constant dense<0.000000e+00> : vector<8x128xf32>
    %11 = tpu.matmul %9, %10, %cst_8 {dimension_numbers = #tpu.dot_dimension_numbers<[1], [0], [0], [1], [0, 0, 1, 1], [], []>} : vector<8x128xbf16>, vector<128x128xbf16>, vector<8x128xf32> -> vector<8x128xf32>
    %12 = vector.extract_strided_slice %11 {offsets = [0, 0], sizes = [8, 2], strides = [1, 1]} : vector<8x128xf32> to vector<8x2xf32>
    %c0_9 = arith.constant 0 : index
    %c0_10 = arith.constant 0 : index
    %13 = vector.load %arg5[%c0_9, %c0_10] : memref<1x2xf32, #tpu.memory_space<vmem>>, vector<1x2xf32>
    %14 = vector.broadcast %13 : vector<1x2xf32> to vector<8x2xf32>
    %15 = arith.addf %12, %14 : vector<8x2xf32>
    %c0_11 = arith.constant 0 : index
    %c0_12 = arith.constant 0 : index
    %16 = vector.load %arg6[%c0_11, %c0_12] : memref<8x2xf32, #tpu.memory_space<vmem>>, vector<8x2xf32>
    tpu.vector_store %arg6[%c0_11, %c0_12], %15 {strides = array<i32>} : memref<8x2xf32, #tpu.memory_space<vmem>>, vector<8x2xf32>,
    return
  }
  func.func @transform_0(%arg0: i32) -> (i32, i32) {
    %c0_i32 = arith.constant 0 : i32
    %c0_i32_0 = arith.constant 0 : i32
    return %arg0, %c0_i32 : i32, i32
  }
  func.func @transform_1(%arg0: i32) -> (i32, i32) {
    %c0_i32 = arith.constant 0 : i32
    %c0_i32_0 = arith.constant 0 : i32
    %c0_i32_1 = arith.constant 0 : i32
    return %c0_i32, %c0_i32_0 : i32, i32
  }
  func.func @transform_2(%arg0: i32) -> (i32, i32) {
    %c0_i32 = arith.constant 0 : i32
    %c0_i32_0 = arith.constant 0 : i32
    %c0_i32_1 = arith.constant 0 : i32
    return %c0_i32, %c0_i32_0 : i32, i32
  }
  func.func @transform_3(%arg0: i32) -> (i32, i32) {
    %c0_i32 = arith.constant 0 : i32
    %c0_i32_0 = arith.constant 0 : i32
    %c0_i32_1 = arith.constant 0 : i32
    return %c0_i32, %c0_i32_0 : i32, i32
  }
  func.func @transform_4(%arg0: i32) -> (i32, i32) {
    %c0_i32 = arith.constant 0 : i32
    %c0_i32_0 = arith.constant 0 : i32
    %c0_i32_1 = arith.constant 0 : i32
    return %c0_i32, %c0_i32_0 : i32, i32
  }
  func.func @transform_5(%arg0: i32) -> (i32, i32) {
    %c0_i32 = arith.constant 0 : i32
    %c0_i32_0 = arith.constant 0 : i32
    return %arg0, %c0_i32 : i32, i32
  }
}

</mosaic_0001>

<llo_original>
// kernel: backfc_forward.1
$region0: #{backfc_forward.1}
  #allocation0 [shape = 'u32[]', space=smem, size = 0x4, offset = 0x4, fixed_abs, tag = 'smem constant byte address 0x4 - core index']
  #allocation1 [shape = 'u32[144,128]{1,0:T(1,128)}', space=vmem, size = 0x12000, scoped, tag = 'internal scratch']
  %s0 = inlined_call_operand.hbm [shape: f32[8,128], index: 0, kind: input, shape index: {}]
  %s1 = inlined_call_operand.hbm [shape: bf16[128,128], index: 1, kind: input, shape index: {}]
  %s2 = inlined_call_operand.vmem [shape: f32[1,128], index: 2, kind: input, shape index: {}]
  %s3 = inlined_call_operand.hbm [shape: bf16[128,128], index: 3, kind: input, shape index: {}]
  %s4 = inlined_call_operand.vmem [shape: f32[1,2], index: 4, kind: input, shape index: {}]
  %s5 = inlined_call_operand.vmem [shape: f32[8,2], index: 5, kind: output, shape index: {}]
  %s6 = sld [smem:[#allocation0]]
  $region42: #{backfc_forward.1} parent=0
    _
  %s8 = ssub.s32 1, %s6
  %s9 = scalar_select 0, %s8, %s6
  $region1: #{backfc_forward.1} parent=0
    #allocation2 [shape = 'u8[4096]{0}', space=vmem, size = 0x1000, scoped, tag = 'input window, operand 0, single buffered']
    #allocation3 [shape = 's32[1]{0}', space=sflag, size = 0x4, scoped, tag = 'scoped memory for backfc_forward.1']
    #allocation4 [shape = 'u8[32768]{0}', space=vmem, size = 0x8000, scoped, tag = 'input window, operand 1, single buffered']
    #allocation5 [shape = 's32[1]{0}', space=sflag, size = 0x4, scoped, tag = 'scoped memory for backfc_forward.1']
    #allocation6 [shape = 'u8[32768]{0}', space=vmem, size = 0x8000, scoped, tag = 'input window, operand 3, single buffered']
    %10 = vsyncpa [#allocation3], 0
    %11 = vsyncpa [#allocation5], 0
    // Predicated region
    $region2: #{backfc_forward.1} parent=1 // pred_check
      _
    $region3: #{backfc_forward.1} parent=1 // pred_check_branch
      %13 = sbr.rel (0) target = $region5
    $region4: #{backfc_forward.1} parent=1 // pred_region
      %s15 = ssub.s32 128, 128
      %16 = vsyncadd [#allocation3], %s15
      %s18 = sshll.u32 [#allocation2], 4
      %s19 = int_to_ptr.vmem [resolvable:$true] %s18
      %21 = dma.hbm_to_vmem [thread:$0]  %s0, 128, %s19, [#allocation3]
    $region5: #{backfc_forward.1} parent=1 // pred_fallthru
      _
    // Predicated region
    $region6: #{backfc_forward.1} parent=1 // pred_check
      _
    $region7: #{backfc_forward.1} parent=1 // pred_check_branch
      %23 = sbr.rel (0) target = $region9
    $region8: #{backfc_forward.1} parent=1 // pred_region
      %s25 = ssub.s32 1024, 1024
      %26 = vsyncadd [#allocation5], %s25
      %s27 = sshll.u32 [#allocation4], 4
      %s28 = int_to_ptr.vmem [resolvable:$true] %s27
      %33 = dma.hbm_to_vmem [thread:$0]  %s1, 1024, %s28, [#allocation5], 64, 64, 4
    $region9: #{backfc_forward.1} parent=1 // pred_fallthru
      _
    // Predicated region
    $region10: #{backfc_forward.1} parent=1 // pred_check
      _
    $region11: #{backfc_forward.1} parent=1 // pred_check_branch
      %35 = sbr.rel (0) target = $region13
    $region12: #{backfc_forward.1} parent=1 // pred_region
      _
    $region13: #{backfc_forward.1} parent=1 // pred_fallthru
      _
    // Predicated region
    $region14: #{backfc_forward.1} parent=1 // pred_check
      _
    $region15: #{backfc_forward.1} parent=1 // pred_check_branch
      %37 = sbr.rel (0) target = $region17
    $region16: #{backfc_forward.1} parent=1 // pred_region
      %s39 = ssub.s32 1024, 1024
      %40 = vsyncadd [#allocation5], %s39
      %s41 = sshll.u32 [#allocation6], 4
      %s42 = int_to_ptr.vmem [resolvable:$true] %s41
      %47 = dma.hbm_to_vmem [thread:$0]  %s3, 1024, %s42, [#allocation5], 64, 64, 4
    $region17: #{backfc_forward.1} parent=1 // pred_fallthru
      _
    // Predicated region
    $region18: #{backfc_forward.1} parent=1 // pred_check
      _
    $region19: #{backfc_forward.1} parent=1 // pred_check_branch
      %49 = sbr.rel (0) target = $region21
    $region20: #{backfc_forward.1} parent=1 // pred_region
      _
    $region21: #{backfc_forward.1} parent=1 // pred_fallthru
      _
    // Predicated region
    $region22: #{backfc_forward.1} parent=1 // pred_check
      _
    $region23: #{backfc_forward.1} parent=1 // pred_check_branch
      %51 = sbr.rel (0) target = $region25
    $region24: #{backfc_forward.1} parent=1 // pred_region
      %52 = dma.done [#allocation3], 128
    $region25: #{backfc_forward.1} parent=1 // pred_fallthru
      _
    // Predicated region
    $region26: #{backfc_forward.1} parent=1 // pred_check
      _
    $region27: #{backfc_forward.1} parent=1 // pred_check_branch
      %54 = sbr.rel (0) target = $region29
    $region28: #{backfc_forward.1} parent=1 // pred_region
      %55 = dma.done [#allocation5], 1024
    $region29: #{backfc_forward.1} parent=1 // pred_fallthru
      _
    // Predicated region
    $region30: #{backfc_forward.1} parent=1 // pred_check
      _
    $region31: #{backfc_forward.1} parent=1 // pred_check_branch
      %57 = sbr.rel (0) target = $region33
    $region32: #{backfc_forward.1} parent=1 // pred_region
      %58 = dma.done [#allocation5], 1024
    $region33: #{backfc_forward.1} parent=1 // pred_fallthru
      _
    %v60 = vld [vmem:[#allocation2] sm:$0xff]
    %v61 = vpack.c.bf16 %v60, %v60
    %v62 = vld [vmem:[#allocation4] sm:$0xf]
    %v63 = vld [vmem:[#allocation4 + $0x4] sm:$0xf]
    %v64 = vld [vmem:[#allocation4 + $0x8] sm:$0xf]
    %v65 = vld [vmem:[#allocation4 + $0xc] sm:$0xf]
    %v66 = vld [vmem:[#allocation4 + $0x10] sm:$0xf]
    %v67 = vld [vmem:[#allocation4 + $0x14] sm:$0xf]
    %v68 = vld [vmem:[#allocation4 + $0x18] sm:$0xf]
    %v69 = vld [vmem:[#allocation4 + $0x1c] sm:$0xf]
    %v70 = vld [vmem:[#allocation4 + $0x20] sm:$0xf]
    %v71 = vld [vmem:[#allocation4 + $0x24] sm:$0xf]
    %v72 = vld [vmem:[#allocation4 + $0x28] sm:$0xf]
    %v73 = vld [vmem:[#allocation4 + $0x2c] sm:$0xf]
    %v74 = vld [vmem:[#allocation4 + $0x30] sm:$0xf]
    %v75 = vld [vmem:[#allocation4 + $0x34] sm:$0xf]
    %v76 = vld [vmem:[#allocation4 + $0x38] sm:$0xf]
    %v77 = vld [vmem:[#allocation4 + $0x3c] sm:$0xf]
    %v78 = vld [vmem:[%s2] sm:$0x1]
    %v80 = vlaneseq
    %v81 = vshrl.u32 %v80, 7
    %v82 = vsub.s32 0, %v81
    %v83 = vrot.slane %v78, %v82
    %v101 = vunpack.c.l.b16 %v62
    %v102 = vunpack.c.l.b16 %v63
    %v103 = vunpack.c.l.b16 %v64
    %v104 = vunpack.c.l.b16 %v65
    %v105 = vunpack.c.l.b16 %v66
    %v106 = vunpack.c.l.b16 %v67
    %v107 = vunpack.c.l.b16 %v68
    %v108 = vunpack.c.l.b16 %v69
    %v109 = vunpack.c.l.b16 %v70
    %v110 = vunpack.c.l.b16 %v71
    %v111 = vunpack.c.l.b16 %v72
    %v112 = vunpack.c.l.b16 %v73
    %v113 = vunpack.c.l.b16 %v74
    %v114 = vunpack.c.l.b16 %v75
    %v115 = vunpack.c.l.b16 %v76
    %v116 = vunpack.c.l.b16 %v77
    %v117 = vpack.c.b16 %v102, %v101
    %v118 = vpack.c.b16 %v104, %v103
    %v119 = vpack.c.b16 %v106, %v105
    %v120 = vpack.c.b16 %v108, %v107
    %v121 = vpack.c.b16 %v110, %v109
    %v122 = vpack.c.b16 %v112, %v111
    %v123 = vpack.c.b16 %v114, %v113
    %v124 = vpack.c.b16 %v116, %v115
    %133 = vmatprep.subr.bf16.mxu0 0
    %134 = vmatpush1.bf16.msra.mxu0 %v117
    %135 = vmatprep.subr.bf16.mxu0 0
    %136 = vmatpush1.bf16.msra.mxu0 %v118
    %137 = vmatprep.subr.bf16.mxu0 0
    %138 = vmatpush1.bf16.msra.mxu0 %v119
    %139 = vmatprep.subr.bf16.mxu0 0
    %140 = vmatpush1.bf16.msra.mxu0 %v120
    %141 = vmatprep.subr.bf16.mxu0 0
    %142 = vmatpush1.bf16.msra.mxu0 %v121
    %143 = vmatprep.subr.bf16.mxu0 0
    %144 = vmatpush1.bf16.msra.mxu0 %v122
    %145 = vmatprep.subr.bf16.mxu0 0
    %146 = vmatpush1.bf16.msra.mxu0 %v123
    %147 = vmatprep.subr.bf16.mxu0 0
    %148 = vmatpush1.bf16.msra.mxu0 %v124
    %149 = vmatprep.subr.bf16.mxu0 0
    %150 = vmatpush1.bf16.msra.mxu0 0
    %151 = vmatprep.subr.bf16.mxu0 0
    %152 = vmatpush1.bf16.msra.mxu0 0
    %153 = vmatprep.subr.bf16.mxu0 0
    %154 = vmatpush1.bf16.msra.mxu0 0
    %155 = vmatprep.subr.bf16.mxu0 0
    %156 = vmatpush1.bf16.msra.mxu0 0
    %157 = vmatprep.subr.bf16.mxu0 0
    %158 = vmatpush1.bf16.msra.mxu0 0
    %159 = vmatprep.subr.bf16.mxu0 0
    %160 = vmatpush1.bf16.msra.mxu0 0
    %161 = vmatprep.subr.bf16.mxu0 0
    %162 = vmatpush1.bf16.msra.mxu0 0
    %163 = vmatprep.subr.bf16.mxu0 0
    %164 = vmatpush1.bf16.msra.mxu0 0
    %165 = vmatprep.mubr.bf16.mxu0 0
    %166 = vmatmul.mubr.bf16.gmra.mrb[0].mxu0 %v61
    %v167 = vpop.f32.mrb[0].mxu0
    %v168 = vadd.f32 %v83, %v167
    %v169 = vpop.f32.mrb[0].mxu0
    %v170 = vpop.f32.mrb[0].mxu0
    %v171 = vpop.f32.mrb[0].mxu0
    %172 = vdwg.mxu0
    %v173 = vmax.f32 %v168, 0.0
    %v174 = vpack.c.bf16 %v173, %v173
    %v175 = vld [vmem:[#allocation6] sm:$0xf]
    %v176 = vld [vmem:[#allocation6 + $0x4] sm:$0xf]
    %v177 = vld [vmem:[#allocation6 + $0x8] sm:$0xf]
    %v178 = vld [vmem:[#allocation6 + $0xc] sm:$0xf]
    %v179 = vld [vmem:[#allocation6 + $0x10] sm:$0xf]
    %v180 = vld [vmem:[#allocation6 + $0x14] sm:$0xf]
    %v181 = vld [vmem:[#allocation6 + $0x18] sm:$0xf]
    %v182 = vld [vmem:[#allocation6 + $0x1c] sm:$0xf]
    %v183 = vld [vmem:[#allocation6 + $0x20] sm:$0xf]
    %v184 = vld [vmem:[#allocation6 + $0x24] sm:$0xf]
    %v185 = vld [vmem:[#allocation6 + $0x28] sm:$0xf]
    %v186 = vld [vmem:[#allocation6 + $0x2c] sm:$0xf]
    %v187 = vld [vmem:[#allocation6 + $0x30] sm:$0xf]
    %v188 = vld [vmem:[#allocation6 + $0x34] sm:$0xf]
    %v189 = vld [vmem:[#allocation6 + $0x38] sm:$0xf]
    %v190 = vld [vmem:[#allocation6 + $0x3c] sm:$0xf]
    %v207 = vunpack.c.l.b16 %v175
    %v208 = vunpack.c.l.b16 %v176
    %v209 = vunpack.c.l.b16 %v177
    %v210 = vunpack.c.l.b16 %v178
    %v211 = vunpack.c.l.b16 %v179
    %v212 = vunpack.c.l.b16 %v180
    %v213 = vunpack.c.l.b16 %v181
    %v214 = vunpack.c.l.b16 %v182
    %v215 = vunpack.c.l.b16 %v183
    %v216 = vunpack.c.l.b16 %v184
    %v217 = vunpack.c.l.b16 %v185
    %v218 = vunpack.c.l.b16 %v186
    %v219 = vunpack.c.l.b16 %v187
    %v220 = vunpack.c.l.b16 %v188
    %v221 = vunpack.c.l.b16 %v189
    %v222 = vunpack.c.l.b16 %v190
    %v223 = vpack.c.b16 %v208, %v207
    %v224 = vpack.c.b16 %v210, %v209
    %v225 = vpack.c.b16 %v212, %v211
    %v226 = vpack.c.b16 %v214, %v213
    %v227 = vpack.c.b16 %v216, %v215
    %v228 = vpack.c.b16 %v218, %v217
    %v229 = vpack.c.b16 %v220, %v219
    %v230 = vpack.c.b16 %v222, %v221
    %239 = vmatprep.subr.bf16.mxu0 0
    %240 = vmatpush1.bf16.msra.mxu0 %v223
    %241 = vmatprep.subr.bf16.mxu0 0
    %242 = vmatpush1.bf16.msra.mxu0 %v224
    %243 = vmatprep.subr.bf16.mxu0 0
    %244 = vmatpush1.bf16.msra.mxu0 %v225
    %245 = vmatprep.subr.bf16.mxu0 0
    %246 = vmatpush1.bf16.msra.mxu0 %v226
    %247 = vmatprep.subr.bf16.mxu0 0
    %248 = vmatpush1.bf16.msra.mxu0 %v227
    %249 = vmatprep.subr.bf16.mxu0 0
    %250 = vmatpush1.bf16.msra.mxu0 %v228
    %251 = vmatprep.subr.bf16.mxu0 0
    %252 = vmatpush1.bf16.msra.mxu0 %v229
    %253 = vmatprep.subr.bf16.mxu0 0
    %254 = vmatpush1.bf16.msra.mxu0 %v230
    %255 = vmatprep.subr.bf16.mxu0 0
    %256 = vmatpush1.bf16.msra.mxu0 0
    %257 = vmatprep.subr.bf16.mxu0 0
    %258 = vmatpush1.bf16.msra.mxu0 0
    %259 = vmatprep.subr.bf16.mxu0 0
    %260 = vmatpush1.bf16.msra.mxu0 0
    %261 = vmatprep.subr.bf16.mxu0 0
    %262 = vmatpush1.bf16.msra.mxu0 0
    %263 = vmatprep.subr.bf16.mxu0 0
    %264 = vmatpush1.bf16.msra.mxu0 0
    %265 = vmatprep.subr.bf16.mxu0 0
    %266 = vmatpush1.bf16.msra.mxu0 0
    %267 = vmatprep.subr.bf16.mxu0 0
    %268 = vmatpush1.bf16.msra.mxu0 0
    %269 = vmatprep.subr.bf16.mxu0 0
    %270 = vmatpush1.bf16.msra.mxu0 0
    %271 = vmatprep.mubr.bf16.mxu0 0
    %272 = vmatmul.mubr.bf16.gmra.mrb[0].mxu0 %v174
    %v273 = vpop.f32.mrb[0].mxu0
    %v274 = vadd.f32 0.0, %v273
    %v275 = vpop.f32.mrb[0].mxu0
    %v276 = vpop.f32.mrb[0].mxu0
    %v277 = vpop.f32.mrb[0].mxu0
    %278 = vdwg.mxu0
    %v279 = vld [vmem:[%s4] sm:$0x1]
    %v281 = vlaneseq
    %v282 = vshrl.u32 %v281, 7
    %v283 = vsub.s32 0, %v282
    %v284 = vrot.slane %v279, %v283
    %v286 = vadd.f32 %v274, %v284
    %vm287 = vcmask 15360
    %288 = vst.msk [vmem:[%s5] sm:$0xff] %vm287, %v286
    // Predicated region
    $region34: #{backfc_forward.1} parent=1 // pred_check
      _
    $region35: #{backfc_forward.1} parent=1 // pred_check_branch
      %290 = sbr.rel (0) target = $region37
    $region36: #{backfc_forward.1} parent=1 // pred_region
      _
    $region37: #{backfc_forward.1} parent=1 // pred_fallthru
      _
    // Predicated region
    $region38: #{backfc_forward.1} parent=1 // pred_check
      _
    $region39: #{backfc_forward.1} parent=1 // pred_check_branch
      %292 = sbr.rel (0) target = $region41
    $region40: #{backfc_forward.1} parent=1 // pred_region
      _
    $region41: #{backfc_forward.1} parent=1 // pred_fallthru
      _
    %293 = vsyncpa [#allocation3], 1
    %294 = vsyncpa [#allocation5], 1

</llo_original>
